<compile_context>
chip_gen: v7x
topology: tpu7x:2x2x1
jax: 0.10.0
libtpu: 0.0.40
codegen_flags: <defaults>
</compile_context>

<pallas_src>
import math
import jax
import jax.numpy as jnp
from jax.experimental import pallas as pl
from jax.experimental.pallas import tpu as pltpu

# ---------------- model dims (small, lane-friendly stand-ins for 1728/256/128) ----
DIM_IN = 128      # stands in for 3*24*24 = 1728
DIM_HID = 128     # stands in for 256
DIM_KQ = 64       # stands in for 128 (keeps dim_KQ == dim_hid // 2, as in the module)
LN_EPS = 1e-5

assert 2 * DIM_KQ == DIM_HID, "vecs packing assumes 2*dim_KQ == dim_hid (as in the module)"


def _layernorm(h, gamma, beta):
    # single-pass statistics: sum + sum-of-squares (one less XLU reduction vs two means)
    inv_n = 1.0 / h.shape[-1]
    s = jnp.sum(h, axis=-1, keepdims=True)
    ss = jnp.sum(h * h, axis=-1, keepdims=True)
    mu = s * inv_n
    var = ss * inv_n - mu * mu
    return (h - mu) * jax.lax.rsqrt(var + LN_EPS) * gamma + beta


def transformer_kernel(
    x_ref,        # (B, S, DIM_IN)
    w1_ref,       # (DIM_IN, DIM_HID)
    whid_ref,     # (3, DIM_HID, DIM_HID):  [0]=W_KQ, [1]=W_FC2a, [2]=W_FC2b
    vecs_ref,     # (10, DIM_HID): b1,g1,be1,bkq,b2a,g2a,be2a,b2b,g2b,be2b
    out_ref,      # (B, S, DIM_HID)
):
    B, S, _ = x_ref.shape
    x = x_ref[...].reshape(B * S, DIM_IN)          # leading-dim merge (layout-free)

    b1, g1, be1 = vecs_ref[0], vecs_ref[1], vecs_ref[2]
    bkq = vecs_ref[3]
    b2a, g2a, be2a = vecs_ref[4], vecs_ref[5], vecs_ref[6]
    b2b, g2b, be2b = vecs_ref[7], vecs_ref[8], vecs_ref[9]

    # ---- FC1: Linear -> LayerNorm -> ReLU ----
    h = jnp.dot(x, w1_ref[...], preferred_element_type=jnp.float32) + b1
    y = jnp.maximum(_layernorm(h, g1, be1), 0.0)                    # (B*S, DIM_HID)

    # ---- fused KQ projection, then lane-slice into K and Q ----
    kq = jnp.dot(y, whid_ref[0], preferred_element_type=jnp.float32) + bkq
    K = kq[:, :DIM_KQ].reshape(B, S, DIM_KQ)
    Q = kq[:, DIM_KQ:].reshape(B, S, DIM_KQ)

    # ---- attention:  softmax(Q K^T / sqrt(dim_hid)) @ y + y  (batched einsum) ----
    yb = y.reshape(B, S, DIM_HID)
    scores = jnp.einsum("bqd,bkd->bqk", Q, K, preferred_element_type=jnp.float32)
    # NOTE: the module scales by 1/sqrt(dim_hid) (not dim_KQ); kept for parity.
    scores = scores * (1.0 / math.sqrt(DIM_HID))
    m = jnp.max(scores, axis=-1, keepdims=True)
    e = jnp.exp(scores - m)
    p = e * pl.reciprocal(jnp.sum(e, axis=-1, keepdims=True), approx=True)
    att = jnp.einsum("bqk,bkd->bqd", p, yb, preferred_element_type=jnp.float32) + yb
    att2 = att.reshape(B * S, DIM_HID)

    # ---- FC2: Linear -> LN -> ReLU -> (Dropout=identity) -> Linear -> LN -> ReLU ----
    h2 = jnp.dot(att2, whid_ref[1], preferred_element_type=jnp.float32) + b2a
    h2 = jnp.maximum(_layernorm(h2, g2a, be2a), 0.0)
    h3 = jnp.dot(h2, whid_ref[2], preferred_element_type=jnp.float32) + b2b
    h3 = jnp.maximum(_layernorm(h3, g2b, be2b), 0.0)

    out_ref[...] = (h3 + att2).reshape(B, S, DIM_HID)   # lane-dense (last dim = 128)


def transformer_forward(x, p):
    B, S, _ = x.shape

    # consolidate the 13 parameter arrays into 3 operands (plus x => 4 total)
    w_hid = jnp.stack([p["wkq"], p["w2a"], p["w2b"]])                 # (3, H, H)
    vecs = jnp.stack([p["b1"], p["g1"], p["be1"], p["bkq"],
                      p["b2a"], p["g2a"], p["be2a"],
                      p["b2b"], p["g2b"], p["be2b"]])                 # (10, H)

    vmem = pl.BlockSpec(memory_space=pltpu.MemorySpace.VMEM)
    return pl.pallas_call(
        transformer_kernel,
        out_shape=jax.ShapeDtypeStruct((B, S, DIM_HID), jnp.float32),
        in_specs=[vmem, vmem, vmem, vmem],
        out_specs=vmem,
    )(x, p["w1"], w_hid, vecs)


def init_params(key):
    ks = jax.random.split(key, 4)

    def lin(k, fan_in, fan_out):
        # torch.nn.Linear default init: U(-1/sqrt(fan_in), 1/sqrt(fan_in))
        bound = 1.0 / math.sqrt(fan_in)
        kw, kb = jax.random.split(k)
        w = jax.random.uniform(kw, (fan_in, fan_out), jnp.float32, -bound, bound)
        b = jax.random.uniform(kb, (fan_out,), jnp.float32, -bound, bound)
        return w, b

    w1, b1 = lin(ks[0], DIM_IN, DIM_HID)
    wkq, bkq = lin(ks[1], DIM_HID, 2 * DIM_KQ)
    w2a, b2a = lin(ks[2], DIM_HID, DIM_HID)
    w2b, b2b = lin(ks[3], DIM_HID, DIM_HID)

    ones = jnp.ones((DIM_HID,), jnp.float32)
    zeros = jnp.zeros((DIM_HID,), jnp.float32)

    return {
        "w1": w1, "b1": b1, "g1": ones, "be1": zeros,
        "wkq": wkq, "bkq": bkq,
        "w2a": w2a, "b2a": b2a, "g2a": ones, "be2a": zeros,
        "w2b": w2b, "b2b": b2b, "g2b": ones, "be2b": zeros,
    }


def reference_forward(x, p):
    def ln(h, g, b):
        mu = jnp.mean(h, axis=-1, keepdims=True)
        var = jnp.mean((h - mu) ** 2, axis=-1, keepdims=True)
        return (h - mu) / jnp.sqrt(var + LN_EPS) * g + b

    y = jax.nn.relu(ln(x @ p["w1"] + p["b1"], p["g1"], p["be1"]))
    kq = y @ p["wkq"] + p["bkq"]
    K, Q = kq[..., :DIM_KQ], kq[..., DIM_KQ:]
    att = jax.nn.softmax(jnp.einsum("bsk,btk->bst", Q, K) / math.sqrt(DIM_HID), axis=-1)
    att = jnp.einsum("bst,btd->bsd", att, y) + y
    h = jax.nn.relu(ln(att @ p["w2a"] + p["b2a"], p["g2a"], p["be2a"]))
    h = jax.nn.relu(ln(h @ p["w2b"] + p["b2b"], p["g2b"], p["be2b"]))
    return h + att


if __name__ == "__main__":
    key = jax.random.PRNGKey(0)
    kx, kp = jax.random.split(key)

    B, S = 2, 8
    x = jax.random.normal(kx, (B, S, DIM_IN), jnp.float32)
    params = init_params(kp)

    out = jax.block_until_ready(transformer_forward(x, params))
    ref = reference_forward(x, params)

    assert out.shape == (B, S, DIM_HID)
    max_err = float(jnp.max(jnp.abs(out - ref)))
    # tolerance slightly relaxed vs 1e-4 because the softmax denominator uses the
    # EUP approximate reciprocal (per perf review); still tight enough to catch bugs.
    assert jnp.allclose(out, ref, atol=2e-3, rtol=2e-3), f"mismatch vs reference (max abs err {max_err})"

    print("KERNEL_OK")
</pallas_src>

<mosaic_0001>
module attributes {stable_mosaic.version = 11 : i64} {
  func.func @transformer_kernel(%arg0: memref<2x8x128xf32, #tpu.memory_space<vmem>>, %arg1: memref<128x128xf32, #tpu.memory_space<vmem>>, %arg2: memref<3x128x128xf32, #tpu.memory_space<vmem>>, %arg3: memref<10x128xf32, #tpu.memory_space<vmem>>, %arg4: memref<2x8x128xf32, #tpu.memory_space<vmem>>) attributes {dimension_semantics = [], scalar_prefetch = 0 : i64, scratch_operands = 0 : i64, tpu.core_type = #tpu.core_type<tc>} {
    %c0 = arith.constant 0 : index
    %c0_0 = arith.constant 0 : index
    %c0_1 = arith.constant 0 : index
    %0 = vector.load %arg0[%c0, %c0_0, %c0_1] : memref<2x8x128xf32, #tpu.memory_space<vmem>>, vector<2x8x128xf32>
    %1 = vector.shape_cast %0 : vector<2x8x128xf32> to vector<16x128xf32>
    %c0_2 = arith.constant 0 : index
    %c0_3 = arith.constant 0 : index
    %2 = vector.load %arg3[%c0_2, %c0_3] : memref<10x128xf32, #tpu.memory_space<vmem>>, vector<1x128xf32>
    %3 = vector.shape_cast %2 : vector<1x128xf32> to vector<128xf32>
    %c1 = arith.constant 1 : index
    %c0_4 = arith.constant 0 : index
    %4 = vector.load %arg3[%c1, %c0_4] : memref<10x128xf32, #tpu.memory_space<vmem>>, vector<1x128xf32>
    %5 = vector.shape_cast %4 : vector<1x128xf32> to vector<128xf32>
    %c2 = arith.constant 2 : index
    %c0_5 = arith.constant 0 : index
    %6 = vector.load %arg3[%c2, %c0_5] : memref<10x128xf32, #tpu.memory_space<vmem>>, vector<1x128xf32>
    %7 = vector.shape_cast %6 : vector<1x128xf32> to vector<128xf32>
    %c3 = arith.constant 3 : index
    %c0_6 = arith.constant 0 : index
    %8 = vector.load %arg3[%c3, %c0_6] : memref<10x128xf32, #tpu.memory_space<vmem>>, vector<1x128xf32>
    %9 = vector.shape_cast %8 : vector<1x128xf32> to vector<128xf32>
    %c4 = arith.constant 4 : index
    %c0_7 = arith.constant 0 : index
    %10 = vector.load %arg3[%c4, %c0_7] : memref<10x128xf32, #tpu.memory_space<vmem>>, vector<1x128xf32>
    %11 = vector.shape_cast %10 : vector<1x128xf32> to vector<128xf32>
    %c5 = arith.constant 5 : index
    %c0_8 = arith.constant 0 : index
    %12 = vector.load %arg3[%c5, %c0_8] : memref<10x128xf32, #tpu.memory_space<vmem>>, vector<1x128xf32>
    %13 = vector.shape_cast %12 : vector<1x128xf32> to vector<128xf32>
    %c6 = arith.constant 6 : index
    %c0_9 = arith.constant 0 : index
    %14 = vector.load %arg3[%c6, %c0_9] : memref<10x128xf32, #tpu.memory_space<vmem>>, vector<1x128xf32>
    %15 = vector.shape_cast %14 : vector<1x128xf32> to vector<128xf32>
    %c7 = arith.constant 7 : index
    %c0_10 = arith.constant 0 : index
    %16 = vector.load %arg3[%c7, %c0_10] : memref<10x128xf32, #tpu.memory_space<vmem>>, vector<1x128xf32>
    %17 = vector.shape_cast %16 : vector<1x128xf32> to vector<128xf32>
    %c8 = arith.constant 8 : index
    %c0_11 = arith.constant 0 : index
    %18 = vector.load %arg3[%c8, %c0_11] : memref<10x128xf32, #tpu.memory_space<vmem>>, vector<1x128xf32>
    %19 = vector.shape_cast %18 : vector<1x128xf32> to vector<128xf32>
    %c9 = arith.constant 9 : index
    %c0_12 = arith.constant 0 : index
    %20 = vector.load %arg3[%c9, %c0_12] : memref<10x128xf32, #tpu.memory_space<vmem>>, vector<1x128xf32>
    %21 = vector.shape_cast %20 : vector<1x128xf32> to vector<128xf32>
    %c0_13 = arith.constant 0 : index
    %c0_14 = arith.constant 0 : index
    %22 = vector.load %arg1[%c0_13, %c0_14] : memref<128x128xf32, #tpu.memory_space<vmem>>, vector<128x128xf32>
    %cst = arith.constant dense<0.000000e+00> : vector<16x128xf32>
    %23 = tpu.matmul %1, %22, %cst {dimension_numbers = #tpu.dot_dimension_numbers<[1], [0], [0], [1], [0, 0, 1, 1], [], []>} : vector<16x128xf32>, vector<128x128xf32>, vector<16x128xf32> -> vector<16x128xf32>
    %24 = vector.shape_cast %3 : vector<128xf32> to vector<1x128xf32>
    %25 = vector.broadcast %24 : vector<1x128xf32> to vector<16x128xf32>
    %26 = arith.addf %23, %25 : vector<16x128xf32>
    %cst_15 = arith.constant dense<0.000000e+00> : vector<16xf32>
    %27 = vector.multi_reduction <add>, %26, %cst_15 [1] : vector<16x128xf32> to vector<16xf32>
    %28 = vector.shape_cast %27 : vector<16xf32> to vector<16x1xf32>
    %29 = arith.mulf %26, %26 : vector<16x128xf32>
    %cst_16 = arith.constant dense<0.000000e+00> : vector<16xf32>
    %30 = vector.multi_reduction <add>, %29, %cst_16 [1] : vector<16x128xf32> to vector<16xf32>
    %31 = vector.shape_cast %30 : vector<16xf32> to vector<16x1xf32>
    %cst_17 = arith.constant 7.812500e-03 : f32
    %32 = vector.broadcast %cst_17 : f32 to vector<16x1xf32>
    %33 = arith.mulf %28, %32 : vector<16x1xf32>
    %cst_18 = arith.constant 7.812500e-03 : f32
    %34 = vector.broadcast %cst_18 : f32 to vector<16x1xf32>
    %35 = arith.mulf %31, %34 : vector<16x1xf32>
    %36 = arith.mulf %33, %33 : vector<16x1xf32>
    %37 = arith.subf %35, %36 : vector<16x1xf32>
    %38 = vector.broadcast %33 : vector<16x1xf32> to vector<16x128xf32>
    %39 = arith.subf %26, %38 : vector<16x128xf32>
    %cst_19 = arith.constant 9.99999974E-6 : f32
    %40 = vector.broadcast %cst_19 : f32 to vector<16x1xf32>
    %41 = arith.addf %37, %40 : vector<16x1xf32>
    %42 = math.rsqrt %41 : vector<16x1xf32>
    %43 = vector.broadcast %42 : vector<16x1xf32> to vector<16x128xf32>
    %44 = arith.mulf %39, %43 : vector<16x128xf32>
    %45 = vector.shape_cast %5 : vector<128xf32> to vector<1x128xf32>
    %46 = vector.broadcast %45 : vector<1x128xf32> to vector<16x128xf32>
    %47 = arith.mulf %44, %46 : vector<16x128xf32>
    %48 = vector.shape_cast %7 : vector<128xf32> to vector<1x128xf32>
    %49 = vector.broadcast %48 : vector<1x128xf32> to vector<16x128xf32>
    %50 = arith.addf %47, %49 : vector<16x128xf32>
    %cst_20 = arith.constant 0.000000e+00 : f32
    %51 = vector.broadcast %cst_20 : f32 to vector<16x128xf32>
    %52 = arith.maximumf %50, %51 : vector<16x128xf32>
    %c0_21 = arith.constant 0 : index
    %c0_22 = arith.constant 0 : index
    %c0_23 = arith.constant 0 : index
    %53 = vector.load %arg2[%c0_21, %c0_22, %c0_23] : memref<3x128x128xf32, #tpu.memory_space<vmem>>, vector<1x128x128xf32>
    %54 = vector.shape_cast %53 : vector<1x128x128xf32> to vector<128x128xf32>
    %cst_24 = arith.constant dense<0.000000e+00> : vector<16x128xf32>
    %55 = tpu.matmul %52, %54, %cst_24 {dimension_numbers = #tpu.dot_dimension_numbers<[1], [0], [0], [1], [0, 0, 1, 1], [], []>} : vector<16x128xf32>, vector<128x128xf32>, vector<16x128xf32> -> vector<16x128xf32>
    %56 = vector.shape_cast %9 : vector<128xf32> to vector<1x128xf32>
    %57 = vector.broadcast %56 : vector<1x128xf32> to vector<16x128xf32>
    %58 = arith.addf %55, %57 : vector<16x128xf32>
    %59 = vector.extract_strided_slice %58 {offsets = [0, 0], sizes = [16, 64], strides = [1, 1]} : vector<16x128xf32> to vector<16x64xf32>
    %60 = vector.shape_cast %59 : vector<16x64xf32> to vector<2x8x64xf32>
    %61 = vector.extract_strided_slice %58 {offsets = [0, 64], sizes = [16, 64], strides = [1, 1]} : vector<16x128xf32> to vector<16x64xf32>
    %62 = vector.shape_cast %61 : vector<16x64xf32> to vector<2x8x64xf32>
    %63 = vector.shape_cast %52 : vector<16x128xf32> to vector<2x8x128xf32>
    "tpu.trace_start"() <{level = 10 : i32, message = "bqd,bkd->bqk"}> : () -> ()
    %cst_25 = arith.constant dense<0.000000e+00> : vector<2x8x8xf32>
    %64 = tpu.matmul %62, %60, %cst_25 {dimension_numbers = #tpu.dot_dimension_numbers<[2], [2], [1], [1], [0, 0, 0, 1, 1, 1], [0], [0]>} : vector<2x8x64xf32>, vector<2x8x64xf32>, vector<2x8x8xf32> -> vector<2x8x8xf32>
    "tpu.trace_stop"() : () -> ()
    %cst_26 = arith.constant 0.0883883461 : f32
    %65 = vector.broadcast %cst_26 : f32 to vector<2x8x8xf32>
    %66 = arith.mulf %64, %65 : vector<2x8x8xf32>
    %cst_27 = arith.constant dense<0xFF800000> : vector<2x8xf32>
    %67 = vector.multi_reduction <maximumf>, %66, %cst_27 [2] : vector<2x8x8xf32> to vector<2x8xf32>
    %68 = vector.shape_cast %67 : vector<2x8xf32> to vector<2x8x1xf32>
    %69 = vector.broadcast %68 : vector<2x8x1xf32> to vector<2x8x8xf32>
    %70 = arith.subf %66, %69 : vector<2x8x8xf32>
    %71 = math.exp %70 : vector<2x8x8xf32>
    %cst_28 = arith.constant dense<0.000000e+00> : vector<2x8xf32>
    %72 = vector.multi_reduction <add>, %71, %cst_28 [2] : vector<2x8x8xf32> to vector<2x8xf32>
    %73 = vector.shape_cast %72 : vector<2x8xf32> to vector<2x8x1xf32>
    %74 = tpu.reciprocal %73 {approx = true} : vector<2x8x1xf32> -> vector<2x8x1xf32>
    %75 = vector.broadcast %74 : vector<2x8x1xf32> to vector<2x8x8xf32>
    %76 = arith.mulf %71, %75 : vector<2x8x8xf32>
    "tpu.trace_start"() <{level = 10 : i32, message = "bqk,bkd->bqd"}> : () -> ()
    %cst_29 = arith.constant dense<0.000000e+00> : vector<2x8x128xf32>
    %77 = tpu.matmul %76, %63, %cst_29 {dimension_numbers = #tpu.dot_dimension_numbers<[2], [1], [1], [2], [0, 0, 0, 1, 1, 2], [0], [0]>} : vector<2x8x8xf32>, vector<2x8x128xf32>, vector<2x8x128xf32> -> vector<2x8x128xf32>
    "tpu.trace_stop"() : () -> ()
    %78 = arith.addf %77, %63 : vector<2x8x128xf32>
    %79 = vector.shape_cast %78 : vector<2x8x128xf32> to vector<16x128xf32>
    %c1_30 = arith.constant 1 : index
    %c0_31 = arith.constant 0 : index
    %c0_32 = arith.constant 0 : index
    %80 = vector.load %arg2[%c1_30, %c0_31, %c0_32] : memref<3x128x128xf32, #tpu.memory_space<vmem>>, vector<1x128x128xf32>
    %81 = vector.shape_cast %80 : vector<1x128x128xf32> to vector<128x128xf32>
    %cst_33 = arith.constant dense<0.000000e+00> : vector<16x128xf32>
    %82 = tpu.matmul %79, %81, %cst_33 {dimension_numbers = #tpu.dot_dimension_numbers<[1], [0], [0], [1], [0, 0, 1, 1], [], []>} : vector<16x128xf32>, vector<128x128xf32>, vector<16x128xf32> -> vector<16x128xf32>
    %83 = vector.shape_cast %11 : vector<128xf32> to vector<1x128xf32>
    %84 = vector.broadcast %83 : vector<1x128xf32> to vector<16x128xf32>
    %85 = arith.addf %82, %84 : vector<16x128xf32>
    %cst_34 = arith.constant dense<0.000000e+00> : vector<16xf32>
    %86 = vector.multi_reduction <add>, %85, %cst_34 [1] : vector<16x128xf32> to vector<16xf32>
    %87 = vector.shape_cast %86 : vector<16xf32> to vector<16x1xf32>
    %88 = arith.mulf %85, %85 : vector<16x128xf32>
    %cst_35 = arith.constant dense<0.000000e+00> : vector<16xf32>
    %89 = vector.multi_reduction <add>, %88, %cst_35 [1] : vector<16x128xf32> to vector<16xf32>
    %90 = vector.shape_cast %89 : vector<16xf32> to vector<16x1xf32>
    %cst_36 = arith.constant 7.812500e-03 : f32
    %91 = vector.broadcast %cst_36 : f32 to vector<16x1xf32>
    %92 = arith.mulf %87, %91 : vector<16x1xf32>
    %cst_37 = arith.constant 7.812500e-03 : f32
    %93 = vector.broadcast %cst_37 : f32 to vector<16x1xf32>
    %94 = arith.mulf %90, %93 : vector<16x1xf32>
    %95 = arith.mulf %92, %92 : vector<16x1xf32>
    %96 = arith.subf %94, %95 : vector<16x1xf32>
    %97 = vector.broadcast %92 : vector<16x1xf32> to vector<16x128xf32>
    %98 = arith.subf %85, %97 : vector<16x128xf32>
    %cst_38 = arith.constant 9.99999974E-6 : f32
    %99 = vector.broadcast %cst_38 : f32 to vector<16x1xf32>
    %100 = arith.addf %96, %99 : vector<16x1xf32>
    %101 = math.rsqrt %100 : vector<16x1xf32>
    %102 = vector.broadcast %101 : vector<16x1xf32> to vector<16x128xf32>
    %103 = arith.mulf %98, %102 : vector<16x128xf32>
    %104 = vector.shape_cast %13 : vector<128xf32> to vector<1x128xf32>
    %105 = vector.broadcast %104 : vector<1x128xf32> to vector<16x128xf32>
    %106 = arith.mulf %103, %105 : vector<16x128xf32>
    %107 = vector.shape_cast %15 : vector<128xf32> to vector<1x128xf32>
    %108 = vector.broadcast %107 : vector<1x128xf32> to vector<16x128xf32>
    %109 = arith.addf %106, %108 : vector<16x128xf32>
    %cst_39 = arith.constant 0.000000e+00 : f32
    %110 = vector.broadcast %cst_39 : f32 to vector<16x128xf32>
    %111 = arith.maximumf %109, %110 : vector<16x128xf32>
    %c2_40 = arith.constant 2 : index
    %c0_41 = arith.constant 0 : index
    %c0_42 = arith.constant 0 : index
    %112 = vector.load %arg2[%c2_40, %c0_41, %c0_42] : memref<3x128x128xf32, #tpu.memory_space<vmem>>, vector<1x128x128xf32>
    %113 = vector.shape_cast %112 : vector<1x128x128xf32> to vector<128x128xf32>
    %cst_43 = arith.constant dense<0.000000e+00> : vector<16x128xf32>
    %114 = tpu.matmul %111, %113, %cst_43 {dimension_numbers = #tpu.dot_dimension_numbers<[1], [0], [0], [1], [0, 0, 1, 1], [], []>} : vector<16x128xf32>, vector<128x128xf32>, vector<16x128xf32> -> vector<16x128xf32>
    %115 = vector.shape_cast %17 : vector<128xf32> to vector<1x128xf32>
    %116 = vector.broadcast %115 : vector<1x128xf32> to vector<16x128xf32>
    %117 = arith.addf %114, %116 : vector<16x128xf32>
    %cst_44 = arith.constant dense<0.000000e+00> : vector<16xf32>
    %118 = vector.multi_reduction <add>, %117, %cst_44 [1] : vector<16x128xf32> to vector<16xf32>
    %119 = vector.shape_cast %118 : vector<16xf32> to vector<16x1xf32>
    %120 = arith.mulf %117, %117 : vector<16x128xf32>
    %cst_45 = arith.constant dense<0.000000e+00> : vector<16xf32>
    %121 = vector.multi_reduction <add>, %120, %cst_45 [1] : vector<16x128xf32> to vector<16xf32>
    %122 = vector.shape_cast %121 : vector<16xf32> to vector<16x1xf32>
    %cst_46 = arith.constant 7.812500e-03 : f32
    %123 = vector.broadcast %cst_46 : f32 to vector<16x1xf32>
    %124 = arith.mulf %119, %123 : vector<16x1xf32>
    %cst_47 = arith.constant 7.812500e-03 : f32
    %125 = vector.broadcast %cst_47 : f32 to vector<16x1xf32>
    %126 = arith.mulf %122, %125 : vector<16x1xf32>
    %127 = arith.mulf %124, %124 : vector<16x1xf32>
    %128 = arith.subf %126, %127 : vector<16x1xf32>
    %129 = vector.broadcast %124 : vector<16x1xf32> to vector<16x128xf32>
    %130 = arith.subf %117, %129 : vector<16x128xf32>
    %cst_48 = arith.constant 9.99999974E-6 : f32
    %131 = vector.broadcast %cst_48 : f32 to vector<16x1xf32>
    %132 = arith.addf %128, %131 : vector<16x1xf32>
    %133 = math.rsqrt %132 : vector<16x1xf32>
    %134 = vector.broadcast %133 : vector<16x1xf32> to vector<16x128xf32>
    %135 = arith.mulf %130, %134 : vector<16x128xf32>
    %136 = vector.shape_cast %19 : vector<128xf32> to vector<1x128xf32>
    %137 = vector.broadcast %136 : vector<1x128xf32> to vector<16x128xf32>
    %138 = arith.mulf %135, %137 : vector<16x128xf32>
    %139 = vector.shape_cast %21 : vector<128xf32> to vector<1x128xf32>
    %140 = vector.broadcast %139 : vector<1x128xf32> to vector<16x128xf32>
    %141 = arith.addf %138, %140 : vector<16x128xf32>
    %cst_49 = arith.constant 0.000000e+00 : f32
    %142 = vector.broadcast %cst_49 : f32 to vector<16x128xf32>
    %143 = arith.maximumf %141, %142 : vector<16x128xf32>
    %144 = arith.addf %143, %79 : vector<16x128xf32>
    %145 = vector.shape_cast %144 : vector<16x128xf32> to vector<2x8x128xf32>
    %c0_50 = arith.constant 0 : index
    %c0_51 = arith.constant 0 : index
    %c0_52 = arith.constant 0 : index
    %146 = vector.load %arg4[%c0_50, %c0_51, %c0_52] : memref<2x8x128xf32, #tpu.memory_space<vmem>>, vector<2x8x128xf32>
    tpu.vector_store %arg4[%c0_50, %c0_51, %c0_52], %145 {strides = array<i32>} : memref<2x8x128xf32, #tpu.memory_space<vmem>>, vector<2x8x128xf32>,
    return
  }
}

</mosaic_0001>

<llo_original>
// kernel: tpu_custom_call.1
$region0: #{tpu_custom_call.1}
  #allocation0 [shape = 'u32[]', space=smem, size = 0x4, offset = 0x4, fixed_abs, tag = 'smem constant byte address 0x4 - core index']
  #allocation1 [shape = 'u32[144,128]{1,0:T(1,128)}', space=vmem, size = 0x12000, scoped, tag = 'internal scratch']
  %s0 = inlined_call_operand.hbm [shape: f32[2,8,128], index: 0, kind: input, shape index: {}]
  %s1 = inlined_call_operand.hbm [shape: f32[128,128], index: 1, kind: input, shape index: {}]
  %s2 = inlined_call_operand.hbm [shape: f32[3,128,128], index: 2, kind: input, shape index: {}]
  %s3 = inlined_call_operand.hbm [shape: f32[10,128], index: 3, kind: input, shape index: {}]
  %s4 = inlined_call_operand.hbm [shape: f32[2,8,128], index: 4, kind: output, shape index: {}]
  %s5 = sld [smem:[#allocation0]]
  $region42: #{tpu_custom_call.1} parent=0
    _
  %s7 = ssub.s32 1, %s5
  %s8 = scalar_select 0, %s7, %s5
  $region1: #{tpu_custom_call.1} parent=0
    #allocation2 [shape = 'u8[8192]{0}', space=vmem, size = 0x2000, scoped, tag = 'input window, operand 0, single buffered']
    #allocation3 [shape = 's32[1]{0}', space=sflag, size = 0x4, scoped, tag = 'scoped memory for tpu_custom_call.1']
    #allocation4 [shape = 's32[1]{0}', space=sflag, size = 0x4, scoped, tag = 'scoped memory for tpu_custom_call.1']
    #allocation5 [shape = 'u8[65536]{0}', space=vmem, size = 0x10000, scoped, tag = 'input window, operand 1, single buffered']
    #allocation6 [shape = 's32[1]{0}', space=sflag, size = 0x4, scoped, tag = 'scoped memory for tpu_custom_call.1']
    #allocation7 [shape = 'u8[196608]{0}', space=vmem, size = 0x30000, scoped, tag = 'input window, operand 2, single buffered']
    #allocation8 [shape = 'u8[8192]{0}', space=vmem, size = 0x2000, scoped, tag = 'input window, operand 3, single buffered']
    #allocation9 [shape = 's32[1]{0}', space=sflag, size = 0x4, scoped, tag = 'scoped memory for tpu_custom_call.1']
    #allocation10 [shape = 'u8[8192]{0}', space=vmem, size = 0x2000, scoped, tag = 'output window, operand 0, single buffered']
    %9 = vsyncpa [#allocation3], 0
    %10 = vsyncpa [#allocation6], 0
    %11 = vsyncpa [#allocation9], 0
    %12 = vsyncpa [#allocation4], 0
    // Predicated region
    $region2: #{tpu_custom_call.1} parent=1 // pred_check
      _
    $region3: #{tpu_custom_call.1} parent=1 // pred_check_branch
      %14 = sbr.rel (0) target = $region5
    $region4: #{tpu_custom_call.1} parent=1 // pred_region
      %s16 = ssub.s32 256, 256
      %17 = vsyncadd [#allocation3], %s16
      %s18 = sshll.u32 [#allocation2], 4
      %s19 = int_to_ptr.vmem [resolvable:$true] %s18
      %24 = dma.hbm_to_vmem [thread:$0]  %s0, 256, %s19, [#allocation3], 128, 128, 8
    $region5: #{tpu_custom_call.1} parent=1 // pred_fallthru
      _
    // Predicated region
    $region6: #{tpu_custom_call.1} parent=1 // pred_check
      _
    $region7: #{tpu_custom_call.1} parent=1 // pred_check_branch
      %26 = sbr.rel (0) target = $region9
    $region8: #{tpu_custom_call.1} parent=1 // pred_region
      %s28 = ssub.s32 2048, 2048
      %29 = vsyncadd [#allocation6], %s28
      %s30 = sshll.u32 [#allocation5], 4
      %s31 = int_to_ptr.vmem [resolvable:$true] %s30
      %36 = dma.hbm_to_vmem [thread:$0]  %s1, 2048, %s31, [#allocation6], 128, 128, 8
    $region9: #{tpu_custom_call.1} parent=1 // pred_fallthru
      _
    // Predicated region
    $region10: #{tpu_custom_call.1} parent=1 // pred_check
      _
    $region11: #{tpu_custom_call.1} parent=1 // pred_check_branch
      %38 = sbr.rel (0) target = $region13
    $region12: #{tpu_custom_call.1} parent=1 // pred_region
      %s40 = ssub.s32 6144, 6144
      %41 = vsyncadd [#allocation6], %s40
      %s42 = sshll.u32 [#allocation7], 4
      %s43 = int_to_ptr.vmem [resolvable:$true] %s42
      %48 = dma.hbm_to_vmem [thread:$0]  %s2, 6144, %s43, [#allocation6], 128, 128, 8
    $region13: #{tpu_custom_call.1} parent=1 // pred_fallthru
      _
    // Predicated region
    $region14: #{tpu_custom_call.1} parent=1 // pred_check
      _
    $region15: #{tpu_custom_call.1} parent=1 // pred_check_branch
      %50 = sbr.rel (0) target = $region17
    $region16: #{tpu_custom_call.1} parent=1 // pred_region
      %s52 = ssub.s32 256, 256
      %53 = vsyncadd [#allocation9], %s52
      %s54 = sshll.u32 [#allocation8], 4
      %s55 = int_to_ptr.vmem [resolvable:$true] %s54
      %60 = dma.hbm_to_vmem [thread:$0]  %s3, 256, %s55, [#allocation9], 128, 128, 8
    $region17: #{tpu_custom_call.1} parent=1 // pred_fallthru
      _
    // Predicated region
    $region18: #{tpu_custom_call.1} parent=1 // pred_check
      _
    $region19: #{tpu_custom_call.1} parent=1 // pred_check_branch
      %62 = sbr.rel (0) target = $region21
    $region20: #{tpu_custom_call.1} parent=1 // pred_region
      %63 = dma.done [#allocation3], 256
    $region21: #{tpu_custom_call.1} parent=1 // pred_fallthru
      _
    // Predicated region
    $region22: #{tpu_custom_call.1} parent=1 // pred_check
      _
    $region23: #{tpu_custom_call.1} parent=1 // pred_check_branch
      %65 = sbr.rel (0) target = $region25
    $region24: #{tpu_custom_call.1} parent=1 // pred_region
      %66 = dma.done [#allocation6], 2048
    $region25: #{tpu_custom_call.1} parent=1 // pred_fallthru
      _
    // Predicated region
    $region26: #{tpu_custom_call.1} parent=1 // pred_check
      _
    $region27: #{tpu_custom_call.1} parent=1 // pred_check_branch
      %68 = sbr.rel (0) target = $region29
    $region28: #{tpu_custom_call.1} parent=1 // pred_region
      %69 = dma.done [#allocation6], 6144
    $region29: #{tpu_custom_call.1} parent=1 // pred_fallthru
      _
    // Predicated region
    $region30: #{tpu_custom_call.1} parent=1 // pred_check
      _
    $region31: #{tpu_custom_call.1} parent=1 // pred_check_branch
      %71 = sbr.rel (0) target = $region33
    $region32: #{tpu_custom_call.1} parent=1 // pred_region
      %72 = dma.done [#allocation9], 256
    $region33: #{tpu_custom_call.1} parent=1 // pred_fallthru
      _
    %v73 = vld [vmem:[#allocation2] sm:$0xff]
    %v74 = vld [vmem:[#allocation2 + $0x8] sm:$0xff]
    %v75 = vld [vmem:[#allocation8] sm:$0x1]
    %v76 = vld [vmem:[#allocation8 + $0x1] sm:$0x1]
    %v77 = vld [vmem:[#allocation8 + $0x2] sm:$0x1]
    %v78 = vld [vmem:[#allocation8 + $0x3] sm:$0x1]
    %v79 = vld [vmem:[#allocation8 + $0x4] sm:$0x1]
    %v80 = vld [vmem:[#allocation8 + $0x5] sm:$0x1]
    %v81 = vld [vmem:[#allocation8 + $0x6] sm:$0x1]
    %v82 = vld [vmem:[#allocation8 + $0x7] sm:$0x1]
    %v83 = vld [vmem:[#allocation8 + $0x8] sm:$0x1]
    %v84 = vld [vmem:[#allocation8 + $0x9] sm:$0x1]
    %v85 = vld [vmem:[#allocation5] sm:$0xff]
    %v86 = vld [vmem:[#allocation5 + $0x8] sm:$0xff]
    %v87 = vld [vmem:[#allocation5 + $0x10] sm:$0xff]
    %v88 = vld [vmem:[#allocation5 + $0x18] sm:$0xff]
    %v89 = vld [vmem:[#allocation5 + $0x20] sm:$0xff]
    %v90 = vld [vmem:[#allocation5 + $0x28] sm:$0xff]
    %v91 = vld [vmem:[#allocation5 + $0x30] sm:$0xff]
    %v92 = vld [vmem:[#allocation5 + $0x38] sm:$0xff]
    %v93 = vld [vmem:[#allocation5 + $0x40] sm:$0xff]
    %v94 = vld [vmem:[#allocation5 + $0x48] sm:$0xff]
    %v95 = vld [vmem:[#allocation5 + $0x50] sm:$0xff]
    %v96 = vld [vmem:[#allocation5 + $0x58] sm:$0xff]
    %v97 = vld [vmem:[#allocation5 + $0x60] sm:$0xff]
    %v98 = vld [vmem:[#allocation5 + $0x68] sm:$0xff]
    %v99 = vld [vmem:[#allocation5 + $0x70] sm:$0xff]
    %v100 = vld [vmem:[#allocation5 + $0x78] sm:$0xff]
    %v101 = vlaneseq
    %v102 = vshrl.u32 %v101, 7
    %v103 = vsub.s32 0, %v102
    %v104 = vrot.slane %v75, %v103
    %105 = vmatprep.subr.mxu0 0.0
    %106 = vmatpush1.msra.mxu0 %v85
    %107 = vmatprep.subr.mxu0 0.0
    %108 = vmatpush1.msra.mxu0 %v86
    %109 = vmatprep.subr.mxu0 0.0
    %110 = vmatpush1.msra.mxu0 %v87
    %111 = vmatprep.subr.mxu0 0.0
    %112 = vmatpush1.msra.mxu0 %v88
    %113 = vmatprep.subr.mxu0 0.0
    %114 = vmatpush1.msra.mxu0 %v89
    %115 = vmatprep.subr.mxu0 0.0
    %116 = vmatpush1.msra.mxu0 %v90
    %117 = vmatprep.subr.mxu0 0.0
    %118 = vmatpush1.msra.mxu0 %v91
    %119 = vmatprep.subr.mxu0 0.0
    %120 = vmatpush1.msra.mxu0 %v92
    %121 = vmatprep.subr.mxu0 0.0
    %122 = vmatpush1.msra.mxu0 %v93
    %123 = vmatprep.subr.mxu0 0.0
    %124 = vmatpush1.msra.mxu0 %v94
    %125 = vmatprep.subr.mxu0 0.0
    %126 = vmatpush1.msra.mxu0 %v95
    %127 = vmatprep.subr.mxu0 0.0
    %128 = vmatpush1.msra.mxu0 %v96
    %129 = vmatprep.subr.mxu0 0.0
    %130 = vmatpush1.msra.mxu0 %v97
    %131 = vmatprep.subr.mxu0 0.0
    %132 = vmatpush1.msra.mxu0 %v98
    %133 = vmatprep.subr.mxu0 0.0
    %134 = vmatpush1.msra.mxu0 %v99
    %135 = vmatprep.subr.mxu0 0.0
    %136 = vmatpush1.msra.mxu0 %v100
    %137 = vmatprep.subr.mxu0 0.0
    %138 = vmatpush1.msra.mxu0 0.0
    %139 = vmatprep.subr.mxu0 0.0
    %140 = vmatpush1.msra.mxu0 0.0
    %141 = vmatprep.subr.mxu0 0.0
    %142 = vmatpush1.msra.mxu0 0.0
    %143 = vmatprep.subr.mxu0 0.0
    %144 = vmatpush1.msra.mxu0 0.0
    %145 = vmatprep.subr.mxu0 0.0
    %146 = vmatpush1.msra.mxu0 0.0
    %147 = vmatprep.subr.mxu0 0.0
    %148 = vmatpush1.msra.mxu0 0.0
    %149 = vmatprep.subr.mxu0 0.0
    %150 = vmatpush1.msra.mxu0 0.0
    %151 = vmatprep.subr.mxu0 0.0
    %152 = vmatpush1.msra.mxu0 0.0
    %153 = vmatprep.subr.mxu0 0.0
    %154 = vmatpush1.msra.mxu0 0.0
    %155 = vmatprep.subr.mxu0 0.0
    %156 = vmatpush1.msra.mxu0 0.0
    %157 = vmatprep.subr.mxu0 0.0
    %158 = vmatpush1.msra.mxu0 0.0
    %159 = vmatprep.subr.mxu0 0.0
    %160 = vmatpush1.msra.mxu0 0.0
    %161 = vmatprep.subr.mxu0 0.0
    %162 = vmatpush1.msra.mxu0 0.0
    %163 = vmatprep.subr.mxu0 0.0
    %164 = vmatpush1.msra.mxu0 0.0
    %165 = vmatprep.subr.mxu0 0.0
    %166 = vmatpush1.msra.mxu0 0.0
    %167 = vmatprep.subr.mxu0 0.0
    %168 = vmatpush1.msra.mxu0 0.0
    %169 = vmatprep.mubr.f32.mxu0 0.0
    %170 = vmatmul.mubr.f32.gmra.mrb[0].mxu0 %v73
    %v171 = vpop.f32.mrb[0].mxu0
    %v172 = vadd.f32 %v104, %v171
    %v173 = vpop.f32.mrb[0].mxu0
    %174 = vmatprep.mubr.f32.mxu0 0.0
    %175 = vmatmul.mubr.f32.gmra.mrb[0].mxu0 %v74
    %v176 = vpop.f32.mrb[0].mxu0
    %v177 = vadd.f32 %v104, %v176
    %v178 = vpop.f32.mrb[0].mxu0
    %179 = vdwg.mxu0
    %180 = vadd.xlane.f32.xlu0 %v172
    %v181 = vpop.xlane.xlu0 %180
    %182 = vadd.xlane.f32.xlu0 %v177
    %v183 = vpop.xlane.xlu0 %182
    %v184 = vmul.f32 %v172, %v172
    %v185 = vmul.f32 %v177, %v177
    %186 = vadd.xlane.f32.xlu0 %v184
    %v187 = vpop.xlane.xlu0 %186
    %188 = vadd.xlane.f32.xlu0 %v185
    %v189 = vpop.xlane.xlu0 %188
    %v190 = vmul.f32 %v181, 0.0078125
    %v191 = vmul.f32 %v183, 0.0078125
    %v192 = vmul.f32 %v187, 0.0078125
    %v193 = vmul.f32 %v189, 0.0078125
    %v194 = vmul.f32 %v190, %v190
    %v195 = vmul.f32 %v191, %v191
    %v196 = vsub.f32 %v192, %v194
    %v197 = vsub.f32 %v193, %v195
    %v198 = vsub.f32 %v172, %v190
    %v199 = vsub.f32 %v177, %v191
    %v200 = vadd.f32 %v196, 1e-05
    %v201 = vadd.f32 %v197, 1e-05
    %v202 = vrsqrt.pop %v200
    %v203 = vrsqrt.pop %v201
    %v204 = vmul.f32 %v198, %v202
    %v205 = vmul.f32 %v199, %v203
    %v206 = vlaneseq
    %v207 = vshrl.u32 %v206, 7
    %v208 = vsub.s32 0, %v207
    %v209 = vrot.slane %v76, %v208
    %v210 = vmul.f32 %v204, %v209
    %v211 = vmul.f32 %v205, %v209
    %v212 = vlaneseq
    %v213 = vshrl.u32 %v212, 7
    %v214 = vsub.s32 0, %v213
    %v215 = vrot.slane %v77, %v214
    %v216 = vadd.f32 %v210, %v215
    %v217 = vadd.f32 %v211, %v215
    %v218 = vmax.f32 %v216, 0.0
    %v219 = vmax.f32 %v217, 0.0
    %v220 = vld [vmem:[#allocation7] sm:$0xff]
    %v221 = vld [vmem:[#allocation7 + $0x8] sm:$0xff]
    %v222 = vld [vmem:[#allocation7 + $0x10] sm:$0xff]
    %v223 = vld [vmem:[#allocation7 + $0x18] sm:$0xff]
    %v224 = vld [vmem:[#allocation7 + $0x20] sm:$0xff]
    %v225 = vld [vmem:[#allocation7 + $0x28] sm:$0xff]
    %v226 = vld [vmem:[#allocation7 + $0x30] sm:$0xff]
    %v227 = vld [vmem:[#allocation7 + $0x38] sm:$0xff]
    %v228 = vld [vmem:[#allocation7 + $0x40] sm:$0xff]
    %v229 = vld [vmem:[#allocation7 + $0x48] sm:$0xff]
    %v230 = vld [vmem:[#allocation7 + $0x50] sm:$0xff]
    %v231 = vld [vmem:[#allocation7 + $0x58] sm:$0xff]
    %v232 = vld [vmem:[#allocation7 + $0x60] sm:$0xff]
    %v233 = vld [vmem:[#allocation7 + $0x68] sm:$0xff]
    %v234 = vld [vmem:[#allocation7 + $0x70] sm:$0xff]
    %v235 = vld [vmem:[#allocation7 + $0x78] sm:$0xff]
    %v236 = vlaneseq
    %v237 = vshrl.u32 %v236, 7
    %v238 = vsub.s32 0, %v237
    %v239 = vrot.slane %v78, %v238
    %240 = vmatprep.subr.mxu0 0.0
    %241 = vmatpush1.msra.mxu0 %v220
    %242 = vmatprep.subr.mxu0 0.0
    %243 = vmatpush1.msra.mxu0 %v221
    %244 = vmatprep.subr.mxu0 0.0
    %245 = vmatpush1.msra.mxu0 %v222
    %246 = vmatprep.subr.mxu0 0.0
    %247 = vmatpush1.msra.mxu0 %v223
    %248 = vmatprep.subr.mxu0 0.0
    %249 = vmatpush1.msra.mxu0 %v224
    %250 = vmatprep.subr.mxu0 0.0
    %251 = vmatpush1.msra.mxu0 %v225
    %252 = vmatprep.subr.mxu0 0.0
    %253 = vmatpush1.msra.mxu0 %v226
    %254 = vmatprep.subr.mxu0 0.0
    %255 = vmatpush1.msra.mxu0 %v227
    %256 = vmatprep.subr.mxu0 0.0
    %257 = vmatpush1.msra.mxu0 %v228
    %258 = vmatprep.subr.mxu0 0.0
    %259 = vmatpush1.msra.mxu0 %v229
    %260 = vmatprep.subr.mxu0 0.0
    %261 = vmatpush1.msra.mxu0 %v230
    %262 = vmatprep.subr.mxu0 0.0
    %263 = vmatpush1.msra.mxu0 %v231
    %264 = vmatprep.subr.mxu0 0.0
    %265 = vmatpush1.msra.mxu0 %v232
    %266 = vmatprep.subr.mxu0 0.0
    %267 = vmatpush1.msra.mxu0 %v233
    %268 = vmatprep.subr.mxu0 0.0
    %269 = vmatpush1.msra.mxu0 %v234
    %270 = vmatprep.subr.mxu0 0.0
    %271 = vmatpush1.msra.mxu0 %v235
    %272 = vmatprep.subr.mxu0 0.0
    %273 = vmatpush1.msra.mxu0 0.0
    %274 = vmatprep.subr.mxu0 0.0
    %275 = vmatpush1.msra.mxu0 0.0
    %276 = vmatprep.subr.mxu0 0.0
    %277 = vmatpush1.msra.mxu0 0.0
    %278 = vmatprep.subr.mxu0 0.0
    %279 = vmatpush1.msra.mxu0 0.0
    %280 = vmatprep.subr.mxu0 0.0
    %281 = vmatpush1.msra.mxu0 0.0
    %282 = vmatprep.subr.mxu0 0.0
    %283 = vmatpush1.msra.mxu0 0.0
    %284 = vmatprep.subr.mxu0 0.0
    %285 = vmatpush1.msra.mxu0 0.0
    %286 = vmatprep.subr.mxu0 0.0
    %287 = vmatpush1.msra.mxu0 0.0
    %288 = vmatprep.subr.mxu0 0.0
    %289 = vmatpush1.msra.mxu0 0.0
    %290 = vmatprep.subr.mxu0 0.0
    %291 = vmatpush1.msra.mxu0 0.0
    %292 = vmatprep.subr.mxu0 0.0
    %293 = vmatpush1.msra.mxu0 0.0
    %294 = vmatprep.subr.mxu0 0.0
    %295 = vmatpush1.msra.mxu0 0.0
    %296 = vmatprep.subr.mxu0 0.0
    %297 = vmatpush1.msra.mxu0 0.0
    %298 = vmatprep.subr.mxu0 0.0
    %299 = vmatpush1.msra.mxu0 0.0
    %300 = vmatprep.subr.mxu0 0.0
    %301 = vmatpush1.msra.mxu0 0.0
    %302 = vmatprep.subr.mxu0 0.0
    %303 = vmatpush1.msra.mxu0 0.0
    %304 = vmatprep.mubr.f32.mxu0 0.0
    %305 = vmatmul.mubr.f32.gmra.mrb[0].mxu0 %v218
    %v306 = vpop.f32.mrb[0].mxu0
    %v307 = vadd.f32 %v239, %v306
    %v308 = vpop.f32.mrb[0].mxu0
    %309 = vmatprep.mubr.f32.mxu0 0.0
    %310 = vmatmul.mubr.f32.gmra.mrb[0].mxu0 %v219
    %v311 = vpop.f32.mrb[0].mxu0
    %v312 = vadd.f32 %v239, %v311
    %v313 = vpop.f32.mrb[0].mxu0
    %314 = vdwg.mxu0
    %316 = vrot.lane.b32.xlu0 %v307, 64
    %v317 = vpop.permute.xlu0 %316
    %vm318 = vcmask 523264
    %v319 = vsel %vm318, %v317, 0
    %v321 = vsel %vm318, %v307, 0
    %323 = vmatprep.subr.mxu0 0.0
    %324 = vmatpush1.xpose.msra.mxu0 %v321
    %325 = vmatprep.subr.mxu0 0.0
    %326 = vmatpush1.xpose.msra.mxu0 0.0
    %327 = vmatprep.subr.mxu0 0.0
    %328 = vmatpush1.xpose.msra.mxu0 0.0
    %329 = vmatprep.subr.mxu0 0.0
    %330 = vmatpush1.xpose.msra.mxu0 0.0
    %331 = vmatprep.subr.mxu0 0.0
    %332 = vmatpush1.xpose.msra.mxu0 0.0
    %333 = vmatprep.subr.mxu0 0.0
    %334 = vmatpush1.xpose.msra.mxu0 0.0
    %335 = vmatprep.subr.mxu0 0.0
    %336 = vmatpush1.xpose.msra.mxu0 0.0
    %337 = vmatprep.subr.mxu0 0.0
    %338 = vmatpush1.xpose.msra.mxu0 0.0
    %339 = vmatprep.subr.mxu0 0.0
    %340 = vmatpush1.xpose.msra.mxu0 0.0
    %341 = vmatprep.subr.mxu0 0.0
    %342 = vmatpush1.xpose.msra.mxu0 0.0
    %343 = vmatprep.subr.mxu0 0.0
    %344 = vmatpush1.xpose.msra.mxu0 0.0
    %345 = vmatprep.subr.mxu0 0.0
    %346 = vmatpush1.xpose.msra.mxu0 0.0
    %347 = vmatprep.subr.mxu0 0.0
    %348 = vmatpush1.xpose.msra.mxu0 0.0
    %349 = vmatprep.subr.mxu0 0.0
    %350 = vmatpush1.xpose.msra.mxu0 0.0
    %351 = vmatprep.subr.mxu0 0.0
    %352 = vmatpush1.xpose.msra.mxu0 0.0
    %353 = vmatprep.subr.mxu0 0.0
    %354 = vmatpush1.xpose.msra.mxu0 0.0
    %355 = vmatprep.subr.mxu0 0.0
    %356 = vmatpush1.xpose.msra.mxu0 0.0
    %357 = vmatprep.subr.mxu0 0.0
    %358 = vmatpush1.xpose.msra.mxu0 0.0
    %359 = vmatprep.subr.mxu0 0.0
    %360 = vmatpush1.xpose.msra.mxu0 0.0
    %361 = vmatprep.subr.mxu0 0.0
    %362 = vmatpush1.xpose.msra.mxu0 0.0
    %363 = vmatprep.subr.mxu0 0.0
    %364 = vmatpush1.xpose.msra.mxu0 0.0
    %365 = vmatprep.subr.mxu0 0.0
    %366 = vmatpush1.xpose.msra.mxu0 0.0
    %367 = vmatprep.subr.mxu0 0.0
    %368 = vmatpush1.xpose.msra.mxu0 0.0
    %369 = vmatprep.subr.mxu0 0.0
    %370 = vmatpush1.xpose.msra.mxu0 0.0
    %371 = vmatprep.subr.mxu0 0.0
    %372 = vmatpush1.xpose.msra.mxu0 0.0
    %373 = vmatprep.subr.mxu0 0.0
    %374 = vmatpush1.xpose.msra.mxu0 0.0
    %375 = vmatprep.subr.mxu0 0.0
    %376 = vmatpush1.xpose.msra.mxu0 0.0
    %377 = vmatprep.subr.mxu0 0.0
    %378 = vmatpush1.xpose.msra.mxu0 0.0
    %379 = vmatprep.subr.mxu0 0.0
    %380 = vmatpush1.xpose.msra.mxu0 0.0
    %381 = vmatprep.subr.mxu0 0.0
    %382 = vmatpush1.xpose.msra.mxu0 0.0
    %383 = vmatprep.subr.mxu0 0.0
    %384 = vmatpush1.xpose.msra.mxu0 0.0
    %385 = vmatprep.subr.mxu0 0.0
    %386 = vmatpush1.xpose.msra.mxu0 0.0
    %387 = vmatprep.mubr.f32.mxu0 0.0
    %388 = vmatmul.mubr.f32.gmra.mrb[0].mxu0 %v319
    %v389 = vpop.f32.mrb[0].mxu0
    %v390 = vadd.f32 0.0, %v389
    %v391 = vpop.f32.mrb[0].mxu0
    %392 = vdwg.mxu0
    %394 = vrot.lane.b32.xlu0 %v312, 64
    %v395 = vpop.permute.xlu0 %394
    %v396 = vsel %vm318, %v395, 0
    %v398 = vsel %vm318, %v312, 0
    %400 = vmatprep.subr.mxu0 0.0
    %401 = vmatpush1.xpose.msra.mxu0 %v398
    %402 = vmatprep.subr.mxu0 0.0
    %403 = vmatpush1.xpose.msra.mxu0 0.0
    %404 = vmatprep.subr.mxu0 0.0
    %405 = vmatpush1.xpose.msra.mxu0 0.0
    %406 = vmatprep.subr.mxu0 0.0
    %407 = vmatpush1.xpose.msra.mxu0 0.0
    %408 = vmatprep.subr.mxu0 0.0
    %409 = vmatpush1.xpose.msra.mxu0 0.0
    %410 = vmatprep.subr.mxu0 0.0
    %411 = vmatpush1.xpose.msra.mxu0 0.0
    %412 = vmatprep.subr.mxu0 0.0
    %413 = vmatpush1.xpose.msra.mxu0 0.0
    %414 = vmatprep.subr.mxu0 0.0
    %415 = vmatpush1.xpose.msra.mxu0 0.0
    %416 = vmatprep.subr.mxu0 0.0
    %417 = vmatpush1.xpose.msra.mxu0 0.0
    %418 = vmatprep.subr.mxu0 0.0
    %419 = vmatpush1.xpose.msra.mxu0 0.0
    %420 = vmatprep.subr.mxu0 0.0
    %421 = vmatpush1.xpose.msra.mxu0 0.0
    %422 = vmatprep.subr.mxu0 0.0
    %423 = vmatpush1.xpose.msra.mxu0 0.0
    %424 = vmatprep.subr.mxu0 0.0
    %425 = vmatpush1.xpose.msra.mxu0 0.0
    %426 = vmatprep.subr.mxu0 0.0
    %427 = vmatpush1.xpose.msra.mxu0 0.0
    %428 = vmatprep.subr.mxu0 0.0
    %429 = vmatpush1.xpose.msra.mxu0 0.0
    %430 = vmatprep.subr.mxu0 0.0
    %431 = vmatpush1.xpose.msra.mxu0 0.0
    %432 = vmatprep.subr.mxu0 0.0
    %433 = vmatpush1.xpose.msra.mxu0 0.0
    %434 = vmatprep.subr.mxu0 0.0
    %435 = vmatpush1.xpose.msra.mxu0 0.0
    %436 = vmatprep.subr.mxu0 0.0
    %437 = vmatpush1.xpose.msra.mxu0 0.0
    %438 = vmatprep.subr.mxu0 0.0
    %439 = vmatpush1.xpose.msra.mxu0 0.0
    %440 = vmatprep.subr.mxu0 0.0
    %441 = vmatpush1.xpose.msra.mxu0 0.0
    %442 = vmatprep.subr.mxu0 0.0
    %443 = vmatpush1.xpose.msra.mxu0 0.0
    %444 = vmatprep.subr.mxu0 0.0
    %445 = vmatpush1.xpose.msra.mxu0 0.0
    %446 = vmatprep.subr.mxu0 0.0
    %447 = vmatpush1.xpose.msra.mxu0 0.0
    %448 = vmatprep.subr.mxu0 0.0
    %449 = vmatpush1.xpose.msra.mxu0 0.0
    %450 = vmatprep.subr.mxu0 0.0
    %451 = vmatpush1.xpose.msra.mxu0 0.0
    %452 = vmatprep.subr.mxu0 0.0
    %453 = vmatpush1.xpose.msra.mxu0 0.0
    %454 = vmatprep.subr.mxu0 0.0
    %455 = vmatpush1.xpose.msra.mxu0 0.0
    %456 = vmatprep.subr.mxu0 0.0
    %457 = vmatpush1.xpose.msra.mxu0 0.0
    %458 = vmatprep.subr.mxu0 0.0
    %459 = vmatpush1.xpose.msra.mxu0 0.0
    %460 = vmatprep.subr.mxu0 0.0
    %461 = vmatpush1.xpose.msra.mxu0 0.0
    %462 = vmatprep.subr.mxu0 0.0
    %463 = vmatpush1.xpose.msra.mxu0 0.0
    %464 = vmatprep.mubr.f32.mxu0 0.0
    %465 = vmatmul.mubr.f32.gmra.mrb[0].mxu0 %v396
    %v466 = vpop.f32.mrb[0].mxu0
    %v467 = vadd.f32 0.0, %v466
    %v468 = vpop.f32.mrb[0].mxu0
    %469 = vdwg.mxu0
    %v470 = vmul.f32 %v390, 0.088388346
    %v471 = vmul.f32 %v467, 0.088388346
    %vm472 = vcmask 64512
    %v473 = vsel %vm472, %v470, -inf
    %474 = vmax.xlane.f32.xlu0 %v473
    %v475 = vpop.xlane.xlu0 %474
    %v476 = vsel %vm472, %v471, -inf
    %477 = vmax.xlane.f32.xlu0 %v476
    %v478 = vpop.xlane.xlu0 %477
    %v479 = vsub.f32 %v470, %v475
    %v480 = vsub.f32 %v471, %v478
    %v481 = vmul.f32 %v479, 1.442695
    %v482 = vpow.pop %v481
    %v483 = vmul.f32 %v480, 1.442695
    %v484 = vpow.pop %v483
    %v485 = vsel %vm472, %v482, 0.0
    %486 = vadd.xlane.f32.xlu0 %v485
    %v487 = vpop.xlane.xlu0 %486
    %v488 = vsel %vm472, %v484, 0.0
    %489 = vadd.xlane.f32.xlu0 %v488
    %v490 = vpop.xlane.xlu0 %489
    %v491 = vrcp.pop %v487
    %v492 = vrcp.pop %v490
    %v493 = vmul.f32 %v482, %v491
    %v494 = vmul.f32 %v484, %v492
    %v496 = vsel %vm472, %v493, 0
    %498 = vmatprep.subr.mxu0 0.0
    %499 = vmatpush1.msra.mxu0 %v218
    %500 = vmatprep.subr.mxu0 0.0
    %501 = vmatpush1.msra.mxu0 0.0
    %502 = vmatprep.subr.mxu0 0.0
    %503 = vmatpush1.msra.mxu0 0.0
    %504 = vmatprep.subr.mxu0 0.0
    %505 = vmatpush1.msra.mxu0 0.0
    %506 = vmatprep.subr.mxu0 0.0
    %507 = vmatpush1.msra.mxu0 0.0
    %508 = vmatprep.subr.mxu0 0.0
    %509 = vmatpush1.msra.mxu0 0.0
    %510 = vmatprep.subr.mxu0 0.0
    %511 = vmatpush1.msra.mxu0 0.0
    %512 = vmatprep.subr.mxu0 0.0
    %513 = vmatpush1.msra.mxu0 0.0
    %514 = vmatprep.subr.mxu0 0.0
    %515 = vmatpush1.msra.mxu0 0.0
    %516 = vmatprep.subr.mxu0 0.0
    %517 = vmatpush1.msra.mxu0 0.0
    %518 = vmatprep.subr.mxu0 0.0
    %519 = vmatpush1.msra.mxu0 0.0
    %520 = vmatprep.subr.mxu0 0.0
    %521 = vmatpush1.msra.mxu0 0.0
    %522 = vmatprep.subr.mxu0 0.0
    %523 = vmatpush1.msra.mxu0 0.0
    %524 = vmatprep.subr.mxu0 0.0
    %525 = vmatpush1.msra.mxu0 0.0
    %526 = vmatprep.subr.mxu0 0.0
    %527 = vmatpush1.msra.mxu0 0.0
    %528 = vmatprep.subr.mxu0 0.0
    %529 = vmatpush1.msra.mxu0 0.0
    %530 = vmatprep.subr.mxu0 0.0
    %531 = vmatpush1.msra.mxu0 0.0
    %532 = vmatprep.subr.mxu0 0.0
    %533 = vmatpush1.msra.mxu0 0.0
    %534 = vmatprep.subr.mxu0 0.0
    %535 = vmatpush1.msra.mxu0 0.0
    %536 = vmatprep.subr.mxu0 0.0
    %537 = vmatpush1.msra.mxu0 0.0
    %538 = vmatprep.subr.mxu0 0.0
    %539 = vmatpush1.msra.mxu0 0.0
    %540 = vmatprep.subr.mxu0 0.0
    %541 = vmatpush1.msra.mxu0 0.0
    %542 = vmatprep.subr.mxu0 0.0
    %543 = vmatpush1.msra.mxu0 0.0
    %544 = vmatprep.subr.mxu0 0.0
    %545 = vmatpush1.msra.mxu0 0.0
    %546 = vmatprep.subr.mxu0 0.0
    %547 = vmatpush1.msra.mxu0 0.0
    %548 = vmatprep.subr.mxu0 0.0
    %549 = vmatpush1.msra.mxu0 0.0
    %550 = vmatprep.subr.mxu0 0.0
    %551 = vmatpush1.msra.mxu0 0.0
    %552 = vmatprep.subr.mxu0 0.0
    %553 = vmatpush1.msra.mxu0 0.0
    %554 = vmatprep.subr.mxu0 0.0
    %555 = vmatpush1.msra.mxu0 0.0
    %556 = vmatprep.subr.mxu0 0.0
    %557 = vmatpush1.msra.mxu0 0.0
    %558 = vmatprep.subr.mxu0 0.0
    %559 = vmatpush1.msra.mxu0 0.0
    %560 = vmatprep.subr.mxu0 0.0
    %561 = vmatpush1.msra.mxu0 0.0
    %562 = vmatprep.mubr.f32.mxu0 0.0
    %563 = vmatmul.mubr.f32.gmra.mrb[0].mxu0 %v496
    %v564 = vpop.f32.mrb[0].mxu0
    %v565 = vadd.f32 %v218, %v564
    %v566 = vpop.f32.mrb[0].mxu0
    %567 = vdwg.mxu0
    %v569 = vsel %vm472, %v494, 0
    %571 = vmatprep.subr.mxu0 0.0
    %572 = vmatpush1.msra.mxu0 %v219
    %573 = vmatprep.subr.mxu0 0.0
    %574 = vmatpush1.msra.mxu0 0.0
    %575 = vmatprep.subr.mxu0 0.0
    %576 = vmatpush1.msra.mxu0 0.0
    %577 = vmatprep.subr.mxu0 0.0
    %578 = vmatpush1.msra.mxu0 0.0
    %579 = vmatprep.subr.mxu0 0.0
    %580 = vmatpush1.msra.mxu0 0.0
    %581 = vmatprep.subr.mxu0 0.0
    %582 = vmatpush1.msra.mxu0 0.0
    %583 = vmatprep.subr.mxu0 0.0
    %584 = vmatpush1.msra.mxu0 0.0
    %585 = vmatprep.subr.mxu0 0.0
    %586 = vmatpush1.msra.mxu0 0.0
    %587 = vmatprep.subr.mxu0 0.0
    %588 = vmatpush1.msra.mxu0 0.0
    %589 = vmatprep.subr.mxu0 0.0
    %590 = vmatpush1.msra.mxu0 0.0
    %591 = vmatprep.subr.mxu0 0.0
    %592 = vmatpush1.msra.mxu0 0.0
    %593 = vmatprep.subr.mxu0 0.0
    %594 = vmatpush1.msra.mxu0 0.0
    %595 = vmatprep.subr.mxu0 0.0
    %596 = vmatpush1.msra.mxu0 0.0
    %597 = vmatprep.subr.mxu0 0.0
    %598 = vmatpush1.msra.mxu0 0.0
    %599 = vmatprep.subr.mxu0 0.0
    %600 = vmatpush1.msra.mxu0 0.0
    %601 = vmatprep.subr.mxu0 0.0
    %602 = vmatpush1.msra.mxu0 0.0
    %603 = vmatprep.subr.mxu0 0.0
    %604 = vmatpush1.msra.mxu0 0.0
    %605 = vmatprep.subr.mxu0 0.0
    %606 = vmatpush1.msra.mxu0 0.0
    %607 = vmatprep.subr.mxu0 0.0
    %608 = vmatpush1.msra.mxu0 0.0
    %609 = vmatprep.subr.mxu0 0.0
    %610 = vmatpush1.msra.mxu0 0.0
    %611 = vmatprep.subr.mxu0 0.0
    %612 = vmatpush1.msra.mxu0 0.0
    %613 = vmatprep.subr.mxu0 0.0
    %614 = vmatpush1.msra.mxu0 0.0
    %615 = vmatprep.subr.mxu0 0.0
    %616 = vmatpush1.msra.mxu0 0.0
    %617 = vmatprep.subr.mxu0 0.0
    %618 = vmatpush1.msra.mxu0 0.0
    %619 = vmatprep.subr.mxu0 0.0
    %620 = vmatpush1.msra.mxu0 0.0
    %621 = vmatprep.subr.mxu0 0.0
    %622 = vmatpush1.msra.mxu0 0.0
    %623 = vmatprep.subr.mxu0 0.0
    %624 = vmatpush1.msra.mxu0 0.0
    %625 = vmatprep.subr.mxu0 0.0
    %626 = vmatpush1.msra.mxu0 0.0
    %627 = vmatprep.subr.mxu0 0.0
    %628 = vmatpush1.msra.mxu0 0.0
    %629 = vmatprep.subr.mxu0 0.0
    %630 = vmatpush1.msra.mxu0 0.0
    %631 = vmatprep.subr.mxu0 0.0
    %632 = vmatpush1.msra.mxu0 0.0
    %633 = vmatprep.subr.mxu0 0.0
    %634 = vmatpush1.msra.mxu0 0.0
    %635 = vmatprep.mubr.f32.mxu0 0.0
    %636 = vmatmul.mubr.f32.gmra.mrb[0].mxu0 %v569
    %v637 = vpop.f32.mrb[0].mxu0
    %v638 = vadd.f32 %v219, %v637
    %v639 = vpop.f32.mrb[0].mxu0
    %640 = vdwg.mxu0
    %s641 = scalar_lea.vmem [#allocation7], 128
    %v642 = vld [vmem:[%s641] sm:$0xff]
    %v643 = vld [vmem:[%s641 + $0x8] sm:$0xff]
    %v644 = vld [vmem:[%s641 + $0x10] sm:$0xff]
    %v645 = vld [vmem:[%s641 + $0x18] sm:$0xff]
    %v646 = vld [vmem:[%s641 + $0x20] sm:$0xff]
    %v647 = vld [vmem:[%s641 + $0x28] sm:$0xff]
    %v648 = vld [vmem:[%s641 + $0x30] sm:$0xff]
    %v649 = vld [vmem:[%s641 + $0x38] sm:$0xff]
    %v650 = vld [vmem:[%s641 + $0x40] sm:$0xff]
    %v651 = vld [vmem:[%s641 + $0x48] sm:$0xff]
    %v652 = vld [vmem:[%s641 + $0x50] sm:$0xff]
    %v653 = vld [vmem:[%s641 + $0x58] sm:$0xff]
    %v654 = vld [vmem:[%s641 + $0x60] sm:$0xff]
    %v655 = vld [vmem:[%s641 + $0x68] sm:$0xff]
    %v656 = vld [vmem:[%s641 + $0x70] sm:$0xff]
    %v657 = vld [vmem:[%s641 + $0x78] sm:$0xff]
    %v658 = vlaneseq
    %v659 = vshrl.u32 %v658, 7
    %v660 = vsub.s32 0, %v659
    %v661 = vrot.slane %v79, %v660
    %662 = vmatprep.subr.mxu0 0.0
    %663 = vmatpush1.msra.mxu0 %v642
    %664 = vmatprep.subr.mxu0 0.0
    %665 = vmatpush1.msra.mxu0 %v643
    %666 = vmatprep.subr.mxu0 0.0
    %667 = vmatpush1.msra.mxu0 %v644
    %668 = vmatprep.subr.mxu0 0.0
    %669 = vmatpush1.msra.mxu0 %v645
    %670 = vmatprep.subr.mxu0 0.0
    %671 = vmatpush1.msra.mxu0 %v646
    %672 = vmatprep.subr.mxu0 0.0
    %673 = vmatpush1.msra.mxu0 %v647
    %674 = vmatprep.subr.mxu0 0.0
    %675 = vmatpush1.msra.mxu0 %v648
    %676 = vmatprep.subr.mxu0 0.0
    %677 = vmatpush1.msra.mxu0 %v649
    %678 = vmatprep.subr.mxu0 0.0
    %679 = vmatpush1.msra.mxu0 %v650
    %680 = vmatprep.subr.mxu0 0.0
    %681 = vmatpush1.msra.mxu0 %v651
    %682 = vmatprep.subr.mxu0 0.0
    %683 = vmatpush1.msra.mxu0 %v652
    %684 = vmatprep.subr.mxu0 0.0
    %685 = vmatpush1.msra.mxu0 %v653
    %686 = vmatprep.subr.mxu0 0.0
    %687 = vmatpush1.msra.mxu0 %v654
    %688 = vmatprep.subr.mxu0 0.0
    %689 = vmatpush1.msra.mxu0 %v655
    %690 = vmatprep.subr.mxu0 0.0
    %691 = vmatpush1.msra.mxu0 %v656
    %692 = vmatprep.subr.mxu0 0.0
    %693 = vmatpush1.msra.mxu0 %v657
    %694 = vmatprep.subr.mxu0 0.0
    %695 = vmatpush1.msra.mxu0 0.0
    %696 = vmatprep.subr.mxu0 0.0
    %697 = vmatpush1.msra.mxu0 0.0
    %698 = vmatprep.subr.mxu0 0.0
    %699 = vmatpush1.msra.mxu0 0.0
    %700 = vmatprep.subr.mxu0 0.0
    %701 = vmatpush1.msra.mxu0 0.0
    %702 = vmatprep.subr.mxu0 0.0
    %703 = vmatpush1.msra.mxu0 0.0
    %704 = vmatprep.subr.mxu0 0.0
    %705 = vmatpush1.msra.mxu0 0.0
    %706 = vmatprep.subr.mxu0 0.0
    %707 = vmatpush1.msra.mxu0 0.0
    %708 = vmatprep.subr.mxu0 0.0
    %709 = vmatpush1.msra.mxu0 0.0
    %710 = vmatprep.subr.mxu0 0.0
    %711 = vmatpush1.msra.mxu0 0.0
    %712 = vmatprep.subr.mxu0 0.0
    %713 = vmatpush1.msra.mxu0 0.0
    %714 = vmatprep.subr.mxu0 0.0
    %715 = vmatpush1.msra.mxu0 0.0
    %716 = vmatprep.subr.mxu0 0.0
    %717 = vmatpush1.msra.mxu0 0.0
    %718 = vmatprep.subr.mxu0 0.0
    %719 = vmatpush1.msra.mxu0 0.0
    %720 = vmatprep.subr.mxu0 0.0
    %721 = vmatpush1.msra.mxu0 0.0
    %722 = vmatprep.subr.mxu0 0.0
    %723 = vmatpush1.msra.mxu0 0.0
    %724 = vmatprep.subr.mxu0 0.0
    %725 = vmatpush1.msra.mxu0 0.0
    %726 = vmatprep.mubr.f32.mxu0 0.0
    %727 = vmatmul.mubr.f32.gmra.mrb[0].mxu0 %v565
    %v728 = vpop.f32.mrb[0].mxu0
    %v729 = vadd.f32 %v661, %v728
    %v730 = vpop.f32.mrb[0].mxu0
    %731 = vmatprep.mubr.f32.mxu0 0.0
    %732 = vmatmul.mubr.f32.gmra.mrb[0].mxu0 %v638
    %v733 = vpop.f32.mrb[0].mxu0
    %v734 = vadd.f32 %v661, %v733
    %v735 = vpop.f32.mrb[0].mxu0
    %736 = vdwg.mxu0
    %737 = vadd.xlane.f32.xlu0 %v729
    %v738 = vpop.xlane.xlu0 %737
    %739 = vadd.xlane.f32.xlu0 %v734
    %v740 = vpop.xlane.xlu0 %739
    %v741 = vmul.f32 %v729, %v729
    %v742 = vmul.f32 %v734, %v734
    %743 = vadd.xlane.f32.xlu0 %v741
    %v744 = vpop.xlane.xlu0 %743
    %745 = vadd.xlane.f32.xlu0 %v742
    %v746 = vpop.xlane.xlu0 %745
    %v747 = vmul.f32 %v738, 0.0078125
    %v748 = vmul.f32 %v740, 0.0078125
    %v749 = vmul.f32 %v744, 0.0078125
    %v750 = vmul.f32 %v746, 0.0078125
    %v751 = vmul.f32 %v747, %v747
    %v752 = vmul.f32 %v748, %v748
    %v753 = vsub.f32 %v749, %v751
    %v754 = vsub.f32 %v750, %v752
    %v755 = vsub.f32 %v729, %v747
    %v756 = vsub.f32 %v734, %v748
    %v757 = vadd.f32 %v753, 1e-05
    %v758 = vadd.f32 %v754, 1e-05
    %v759 = vrsqrt.pop %v757
    %v760 = vrsqrt.pop %v758
    %v761 = vmul.f32 %v755, %v759
    %v762 = vmul.f32 %v756, %v760
    %v763 = vlaneseq
    %v764 = vshrl.u32 %v763, 7
    %v765 = vsub.s32 0, %v764
    %v766 = vrot.slane %v80, %v765
    %v767 = vmul.f32 %v761, %v766
    %v768 = vmul.f32 %v762, %v766
    %v769 = vlaneseq
    %v770 = vshrl.u32 %v769, 7
    %v771 = vsub.s32 0, %v770
    %v772 = vrot.slane %v81, %v771
    %v773 = vadd.f32 %v767, %v772
    %v774 = vadd.f32 %v768, %v772
    %v775 = vmax.f32 %v773, 0.0
    %v776 = vmax.f32 %v774, 0.0
    %s777 = scalar_lea.vmem [#allocation7], 256
    %v778 = vld [vmem:[%s777] sm:$0xff]
    %v779 = vld [vmem:[%s777 + $0x8] sm:$0xff]
    %v780 = vld [vmem:[%s777 + $0x10] sm:$0xff]
    %v781 = vld [vmem:[%s777 + $0x18] sm:$0xff]
    %v782 = vld [vmem:[%s777 + $0x20] sm:$0xff]
    %v783 = vld [vmem:[%s777 + $0x28] sm:$0xff]
    %v784 = vld [vmem:[%s777 + $0x30] sm:$0xff]
    %v785 = vld [vmem:[%s777 + $0x38] sm:$0xff]
    %v786 = vld [vmem:[%s777 + $0x40] sm:$0xff]
    %v787 = vld [vmem:[%s777 + $0x48] sm:$0xff]
    %v788 = vld [vmem:[%s777 + $0x50] sm:$0xff]
    %v789 = vld [vmem:[%s777 + $0x58] sm:$0xff]
    %v790 = vld [vmem:[%s777 + $0x60] sm:$0xff]
    %v791 = vld [vmem:[%s777 + $0x68] sm:$0xff]
    %v792 = vld [vmem:[%s777 + $0x70] sm:$0xff]
    %v793 = vld [vmem:[%s777 + $0x78] sm:$0xff]
    %v794 = vlaneseq
    %v795 = vshrl.u32 %v794, 7
    %v796 = vsub.s32 0, %v795
    %v797 = vrot.slane %v82, %v796
    %798 = vmatprep.subr.mxu0 0.0
    %799 = vmatpush1.msra.mxu0 %v778
    %800 = vmatprep.subr.mxu0 0.0
    %801 = vmatpush1.msra.mxu0 %v779
    %802 = vmatprep.subr.mxu0 0.0
    %803 = vmatpush1.msra.mxu0 %v780
    %804 = vmatprep.subr.mxu0 0.0
    %805 = vmatpush1.msra.mxu0 %v781
    %806 = vmatprep.subr.mxu0 0.0
    %807 = vmatpush1.msra.mxu0 %v782
    %808 = vmatprep.subr.mxu0 0.0
    %809 = vmatpush1.msra.mxu0 %v783
    %810 = vmatprep.subr.mxu0 0.0
    %811 = vmatpush1.msra.mxu0 %v784
    %812 = vmatprep.subr.mxu0 0.0
    %813 = vmatpush1.msra.mxu0 %v785
    %814 = vmatprep.subr.mxu0 0.0
    %815 = vmatpush1.msra.mxu0 %v786
    %816 = vmatprep.subr.mxu0 0.0
    %817 = vmatpush1.msra.mxu0 %v787
    %818 = vmatprep.subr.mxu0 0.0
    %819 = vmatpush1.msra.mxu0 %v788
    %820 = vmatprep.subr.mxu0 0.0
    %821 = vmatpush1.msra.mxu0 %v789
    %822 = vmatprep.subr.mxu0 0.0
    %823 = vmatpush1.msra.mxu0 %v790
    %824 = vmatprep.subr.mxu0 0.0
    %825 = vmatpush1.msra.mxu0 %v791
    %826 = vmatprep.subr.mxu0 0.0
    %827 = vmatpush1.msra.mxu0 %v792
    %828 = vmatprep.subr.mxu0 0.0
    %829 = vmatpush1.msra.mxu0 %v793
    %830 = vmatprep.subr.mxu0 0.0
    %831 = vmatpush1.msra.mxu0 0.0
    %832 = vmatprep.subr.mxu0 0.0
    %833 = vmatpush1.msra.mxu0 0.0
    %834 = vmatprep.subr.mxu0 0.0
    %835 = vmatpush1.msra.mxu0 0.0
    %836 = vmatprep.subr.mxu0 0.0
    %837 = vmatpush1.msra.mxu0 0.0
    %838 = vmatprep.subr.mxu0 0.0
    %839 = vmatpush1.msra.mxu0 0.0
    %840 = vmatprep.subr.mxu0 0.0
    %841 = vmatpush1.msra.mxu0 0.0
    %842 = vmatprep.subr.mxu0 0.0
    %843 = vmatpush1.msra.mxu0 0.0
    %844 = vmatprep.subr.mxu0 0.0
    %845 = vmatpush1.msra.mxu0 0.0
    %846 = vmatprep.subr.mxu0 0.0
    %847 = vmatpush1.msra.mxu0 0.0
    %848 = vmatprep.subr.mxu0 0.0
    %849 = vmatpush1.msra.mxu0 0.0
    %850 = vmatprep.subr.mxu0 0.0
    %851 = vmatpush1.msra.mxu0 0.0
    %852 = vmatprep.subr.mxu0 0.0
    %853 = vmatpush1.msra.mxu0 0.0
    %854 = vmatprep.subr.mxu0 0.0
    %855 = vmatpush1.msra.mxu0 0.0
    %856 = vmatprep.subr.mxu0 0.0
    %857 = vmatpush1.msra.mxu0 0.0
    %858 = vmatprep.subr.mxu0 0.0
    %859 = vmatpush1.msra.mxu0 0.0
    %860 = vmatprep.subr.mxu0 0.0
    %861 = vmatpush1.msra.mxu0 0.0
    %862 = vmatprep.mubr.f32.mxu0 0.0
    %863 = vmatmul.mubr.f32.gmra.mrb[0].mxu0 %v775
    %v864 = vpop.f32.mrb[0].mxu0
    %v865 = vadd.f32 %v797, %v864
    %v866 = vpop.f32.mrb[0].mxu0
    %867 = vmatprep.mubr.f32.mxu0 0.0
    %868 = vmatmul.mubr.f32.gmra.mrb[0].mxu0 %v776
    %v869 = vpop.f32.mrb[0].mxu0
    %v870 = vadd.f32 %v797, %v869
    %v871 = vpop.f32.mrb[0].mxu0
    %872 = vdwg.mxu0
    %873 = vadd.xlane.f32.xlu0 %v865
    %v874 = vpop.xlane.xlu0 %873
    %875 = vadd.xlane.f32.xlu0 %v870
    %v876 = vpop.xlane.xlu0 %875
    %v877 = vmul.f32 %v865, %v865
    %v878 = vmul.f32 %v870, %v870
    %879 = vadd.xlane.f32.xlu0 %v877
    %v880 = vpop.xlane.xlu0 %879
    %881 = vadd.xlane.f32.xlu0 %v878
    %v882 = vpop.xlane.xlu0 %881
    %v883 = vmul.f32 %v874, 0.0078125
    %v884 = vmul.f32 %v876, 0.0078125
    %v885 = vmul.f32 %v880, 0.0078125
    %v886 = vmul.f32 %v882, 0.0078125
    %v887 = vmul.f32 %v883, %v883
    %v888 = vmul.f32 %v884, %v884
    %v889 = vsub.f32 %v885, %v887
    %v890 = vsub.f32 %v886, %v888
    %v891 = vsub.f32 %v865, %v883
    %v892 = vsub.f32 %v870, %v884
    %v893 = vadd.f32 %v889, 1e-05
    %v894 = vadd.f32 %v890, 1e-05
    %v895 = vrsqrt.pop %v893
    %v896 = vrsqrt.pop %v894
    %v897 = vmul.f32 %v891, %v895
    %v898 = vmul.f32 %v892, %v896
    %v899 = vlaneseq
    %v900 = vshrl.u32 %v899, 7
    %v901 = vsub.s32 0, %v900
    %v902 = vrot.slane %v83, %v901
    %v903 = vmul.f32 %v897, %v902
    %v904 = vmul.f32 %v898, %v902
    %v905 = vlaneseq
    %v906 = vshrl.u32 %v905, 7
    %v907 = vsub.s32 0, %v906
    %v908 = vrot.slane %v84, %v907
    %v909 = vadd.f32 %v903, %v908
    %v910 = vadd.f32 %v904, %v908
    %v911 = vmax.f32 %v909, 0.0
    %v912 = vmax.f32 %v910, 0.0
    %v913 = vadd.f32 %v911, %v565
    %v914 = vadd.f32 %v912, %v638
    %915 = vst [vmem:[#allocation10] sm:$0xff] %v913
    %916 = vst [vmem:[#allocation10 + $0x8] sm:$0xff] %v914
    // Predicated region
    $region34: #{tpu_custom_call.1} parent=1 // pred_check
      _
    $region35: #{tpu_custom_call.1} parent=1 // pred_check_branch
      %918 = sbr.rel (0) target = $region37
    $region36: #{tpu_custom_call.1} parent=1 // pred_region
      %s920 = ssub.s32 256, 256
      %921 = vsyncadd [#allocation4], %s920
      %s922 = sshll.u32 [#allocation10], 4
      %s923 = int_to_ptr.vmem [resolvable:$true] %s922
      %928 = dma.vmem_to_hbm [thread:$0]  %s923, 256, %s4, [#allocation4], 128, 128, 8
    $region37: #{tpu_custom_call.1} parent=1 // pred_fallthru
      _
    // Predicated region
    $region38: #{tpu_custom_call.1} parent=1 // pred_check
      _
    $region39: #{tpu_custom_call.1} parent=1 // pred_check_branch
      %930 = sbr.rel (0) target = $region41
    $region40: #{tpu_custom_call.1} parent=1 // pred_region
      %931 = dma.done [#allocation4], 256
    $region41: #{tpu_custom_call.1} parent=1 // pred_fallthru
      _
    %932 = vsyncpa [#allocation3], 1
    %933 = vsyncpa [#allocation6], 1
    %934 = vsyncpa [#allocation9], 1
    %935 = vsyncpa [#allocation4], 1

</llo_original>
